<compile_context>
chip_gen: v5e
topology: v5e:2x2
jax: 0.10.0
libtpu: 0.0.40
codegen_flags: <defaults>
</compile_context>

<pallas_src>
import jax
import jax.numpy as jnp
from jax.experimental import pallas as pl
from jax.experimental.pallas import tpu as pltpu


def _copy_kernel(x_ref, o_ref):
    # Identity copy of the current tile — the only "compute" a view has.
    o_ref[...] = x_ref[...]


def _round_up(x, m):
    return ((x + m - 1) // m) * m


def _copy_small_whole(flat):
    """Single-block whole-array copy (block shape == array shape, so the
    (8,128) divisibility rule does not apply). Used for tiny/awkward sizes."""
    n = flat.shape[0]
    x2d = flat.reshape(1, n)
    y2d = pl.pallas_call(
        _copy_kernel,
        out_shape=jax.ShapeDtypeStruct((1, n), flat.dtype),
        input_output_aliases={0: 0},
    )(x2d)
    return y2d.reshape(n)


def _copy_tiled(flat, lanes, sublane):
    """Tiled copy of a flat array whose length is a multiple of lanes*sublane."""
    n = flat.shape[0]
    dtype = flat.dtype
    itemsize = jnp.dtype(dtype).itemsize
    rows = n // lanes                              # multiple of `sublane`

    # ~2 MiB blocks, multiple of the dtype-aware sublane count, and an exact
    # divisor of `rows` so every block is full (no masked partial stores).
    target_block_bytes = 2 * 1024 * 1024
    tile_rows = max(sublane,
                    (target_block_bytes // (lanes * itemsize)) // sublane * sublane)
    tile_rows = min(tile_rows, rows)
    while rows % tile_rows != 0:
        tile_rows -= sublane                       # terminates: sublane | rows

    x2d = flat.reshape(rows, lanes)                # metadata-only reshape
    grid = (rows // tile_rows,)
    y2d = pl.pallas_call(
        _copy_kernel,
        out_shape=jax.ShapeDtypeStruct((rows, lanes), dtype),
        grid_spec=pl.GridSpec(
            grid=grid,
            in_specs=[pl.BlockSpec((tile_rows, lanes), lambda i: (i, 0))],
            out_specs=pl.BlockSpec((tile_rows, lanes), lambda i: (i, 0)),
        ),
        input_output_aliases={0: 0},
        compiler_params=pltpu.CompilerParams(
            dimension_semantics=("parallel",),
        ),
        cost_estimate=pl.CostEstimate(
            flops=0,
            transcendentals=0,
            bytes_accessed=2 * n * itemsize,
        ),
    )(x2d)
    return y2d.reshape(n)


def _identity_copy_flat(flat):
    """Copy a flat 1-D array through a lane-dense, fully-tiled Pallas kernel."""
    n = flat.shape[0]
    itemsize = jnp.dtype(flat.dtype).itemsize
    sublane = max(8, 32 // max(itemsize, 1))       # 8 (f32), 16 (bf16), 32 (int8)

    # Widest lane-dense slab that tiles EXACTLY (no pad, no trailing slice).
    lanes = None
    for cand in (1024, 512, 256, 128):
        if n % (cand * sublane) == 0:
            lanes = cand
            break

    if lanes is not None:
        return _copy_tiled(flat, lanes, sublane)

    # Awkward sizes.
    if n * itemsize <= 2 * 1024 * 1024:
        # Small enough for one whole-array block in VMEM.
        return _copy_small_whole(flat)

    # Large & non-tileable: pad up by at most one tile (rare; pad/slice cost is
    # bounded by one tile and negligible vs. the main copy).
    lanes = 512
    rows = _round_up(-(-n // lanes), sublane)
    padded = rows * lanes
    flat_p = jnp.pad(flat, (0, padded - n))
    return _copy_tiled(flat_p, lanes, sublane)[:n]


def _resolve_size(size, total):
    """Resolve a single -1 dimension like torch.Tensor.view does."""
    size = list(size)
    if -1 in size:
        idx = size.index(-1)
        known = 1
        for j, s in enumerate(size):
            if j != idx:
                known *= s
        assert total % known == 0, "view size incompatible with number of elements"
        size[idx] = total // known
    prod = 1
    for s in size:
        prod *= s
    assert prod == total, "view size incompatible with number of elements"
    return tuple(size)


def view_forward(x, size, materialize_copy=False):
    """Pallas-backed equivalent of View(size).forward(x).

    Default path is metadata-only (a view IS metadata-only); set
    materialize_copy=True to route the bytes through the Pallas copy kernel.
    """
    total = int(x.size)
    out_size = _resolve_size(size, total)

    if not materialize_copy:
        # Row-major reshape == torch .view element ordering; zero HBM traffic.
        return x.reshape(out_size)

    flat = x.reshape(total)                 # row-major flatten (matches .view order)
    y_flat = _identity_copy_flat(flat)
    return y_flat.reshape(out_size)


class View:
    """Drop-in analogue of the PyTorch View module (no parameters)."""

    def __init__(self, size):
        self.size = size

    def __call__(self, tensor, materialize_copy=False):
        return view_forward(tensor, self.size, materialize_copy)


if __name__ == "__main__":
    key = jax.random.PRNGKey(0)
    # Small NCHW-style input, as this module typically sits after conv layers.
    x = jax.random.normal(key, (2, 4, 16, 16), dtype=jnp.float32)

    # Typical usage in DeeperAuto: flatten spatial/channel dims -> (batch, -1)
    view = View((2, -1))

    # 1) Pallas copy-kernel path (exercises the tiled kernel, exact tiling).
    y = view(x, materialize_copy=True)
    jax.block_until_ready(y)
    y_ref = x.reshape(2, 4 * 16 * 16)
    assert y.shape == y_ref.shape, (y.shape, y_ref.shape)
    assert y.dtype == y_ref.dtype
    assert bool(jnp.all(y == y_ref))

    # 2) Default metadata-only path (the recommended zero-cost view).
    y_fast = view(x)
    jax.block_until_ready(y_fast)
    assert y_fast.shape == y_ref.shape
    assert bool(jnp.all(y_fast == y_ref))

    # 3) bf16 input exercises the dtype-aware sublane path (16 rows / sublane).
    x_bf16 = x.astype(jnp.bfloat16)
    y_bf16 = view_forward(x_bf16, (8, 4, -1), materialize_copy=True)
    jax.block_until_ready(y_bf16)
    y_bf16_ref = x_bf16.reshape(8, 4, 64)
    assert y_bf16.shape == y_bf16_ref.shape
    assert bool(jnp.all(y_bf16 == y_bf16_ref))

    # 4) Awkward small size (not a multiple of 128) exercises the whole-array
    #    single-block path (no padding, no masked tiling headaches).
    x_small = jax.random.normal(jax.random.PRNGKey(1), (2, 3, 5), dtype=jnp.float32)
    y_small = view_forward(x_small, (6, -1), materialize_copy=True)
    jax.block_until_ready(y_small)
    y_small_ref = x_small.reshape(6, 5)
    assert y_small.shape == y_small_ref.shape
    assert bool(jnp.all(y_small == y_small_ref))

    print("KERNEL_OK")
</pallas_src>

<mosaic_0001>
module attributes {stable_mosaic.version = 11 : i64} {
  func.func @_copy_kernel(%arg0: i32, %arg1: memref<8x256xf32, #tpu.memory_space<vmem>>, %arg2: memref<8x256xf32, #tpu.memory_space<vmem>>) attributes {dimension_semantics = [#tpu.dimension_semantics<parallel>], iteration_bounds = array<i64: 1>, scalar_prefetch = 0 : i64, scratch_operands = 0 : i64, tpu.core_type = #tpu.core_type<tc>, window_params = [{transform_indices = @transform_0, window_bounds = array<i64: 8, 256>}, {transform_indices = @transform_1, window_bounds = array<i64: 8, 256>}]} {
    %c0 = arith.constant 0 : index
    %c0_0 = arith.constant 0 : index
    %0 = vector.load %arg1[%c0, %c0_0] : memref<8x256xf32, #tpu.memory_space<vmem>>, vector<8x256xf32>
    %c0_1 = arith.constant 0 : index
    %c0_2 = arith.constant 0 : index
    %1 = vector.load %arg2[%c0_1, %c0_2] : memref<8x256xf32, #tpu.memory_space<vmem>>, vector<8x256xf32>
    tpu.vector_store %arg2[%c0_1, %c0_2], %0 {strides = array<i32>} : memref<8x256xf32, #tpu.memory_space<vmem>>, vector<8x256xf32>,
    return
  }
  func.func @transform_0(%arg0: i32) -> (i32, i32) {
    %c0_i32 = arith.constant 0 : i32
    %c0_i32_0 = arith.constant 0 : i32
    return %arg0, %c0_i32 : i32, i32
  }
  func.func @transform_1(%arg0: i32) -> (i32, i32) {
    %c0_i32 = arith.constant 0 : i32
    %c0_i32_0 = arith.constant 0 : i32
    return %arg0, %c0_i32 : i32, i32
  }
}

</mosaic_0001>

<llo_original>
// kernel: tpu_custom_call.1
$region0: #{tpu_custom_call.1}
  #allocation0 [shape = 'u32[]', space=smem, size = 0x4, offset = 0x4, fixed_abs, tag = 'smem constant byte address 0x4 - core index']
  #allocation1 [shape = 'u32[72,128]{1,0:T(1,128)}', space=vmem, size = 0x9000, scoped, tag = 'internal scratch']
  %s0 = inlined_call_operand.hbm [shape: f32[8,256], index: 0, kind: input, shape index: {}, may-alias: {0,1}]
  %s1 = inlined_call_operand.hbm [shape: f32[8,256], index: 1, kind: output, shape index: {}, may-alias: {0,1}]
  %s2 = sld [smem:[#allocation0]]
  $region18: #{tpu_custom_call.1} parent=0
    _
  %s4 = ssub.s32 1, %s2
  %s5 = scalar_select 0, %s4, %s2
  $region1: #{tpu_custom_call.1} parent=0
    #allocation2 [shape = 'u8[8192]{0}', space=vmem, size = 0x2000, scoped, tag = 'input window, operand 0, single buffered']
    #allocation3 [shape = 's32[1]{0}', space=sflag, size = 0x4, scoped, tag = 'scoped memory for tpu_custom_call.1']
    #allocation4 [shape = 's32[1]{0}', space=sflag, size = 0x4, scoped, tag = 'scoped memory for tpu_custom_call.1']
    #allocation5 [shape = 'u8[8192]{0}', space=vmem, size = 0x2000, scoped, tag = 'output window, operand 0, single buffered']
    %6 = vsyncpa [#allocation3], 0
    %7 = vsyncpa [#allocation4], 0
    // Predicated region
    $region2: #{tpu_custom_call.1} parent=1 // pred_check
      _
    $region3: #{tpu_custom_call.1} parent=1 // pred_check_branch
      %9 = sbr.rel (0) target = $region5
    $region4: #{tpu_custom_call.1} parent=1 // pred_region
      %11 = vsyncadd [#allocation3], 0
      %s13 = sshll.u32 %s0, 4
      %s14 = int_to_ptr.hbm [resolvable:$true] %s13
      %s15 = sshll.u32 [#allocation2], 4
      %s16 = int_to_ptr.vmem [resolvable:$true] %s15
      %18 = dma.hbm_to_vmem [thread:$0]  %s14, 256, %s16, [#allocation3]
    $region5: #{tpu_custom_call.1} parent=1 // pred_fallthru
      _
    // Predicated region
    $region6: #{tpu_custom_call.1} parent=1 // pred_check
      _
    $region7: #{tpu_custom_call.1} parent=1 // pred_check_branch
      %20 = sbr.rel (0) target = $region9
    $region8: #{tpu_custom_call.1} parent=1 // pred_region
      %22 = dma.done [#allocation3], 256
    $region9: #{tpu_custom_call.1} parent=1 // pred_fallthru
      _
    %v23 = vld [vmem:[#allocation2] sm:$0xff]
    %v24 = vld [vmem:[#allocation2 + $0x8] sm:$0xff]
    %25 = vst [vmem:[#allocation5] sm:$0xff] %v23
    %26 = vst [vmem:[#allocation5 + $0x8] sm:$0xff] %v24
    // Predicated region
    $region10: #{tpu_custom_call.1} parent=1 // pred_check
      _
    $region11: #{tpu_custom_call.1} parent=1 // pred_check_branch
      %28 = sbr.rel (0) target = $region13
    $region12: #{tpu_custom_call.1} parent=1 // pred_region
      %30 = vsyncadd [#allocation4], 0
      %s32 = sshll.u32 [#allocation5], 4
      %s33 = int_to_ptr.vmem [resolvable:$true] %s32
      %s34 = sshll.u32 %s1, 4
      %s35 = int_to_ptr.hbm [resolvable:$true] %s34
      %37 = dma.vmem_to_hbm [thread:$0]  %s33, 256, %s35, [#allocation4]
    $region13: #{tpu_custom_call.1} parent=1 // pred_fallthru
      _
    // Predicated region
    $region14: #{tpu_custom_call.1} parent=1 // pred_check
      _
    $region15: #{tpu_custom_call.1} parent=1 // pred_check_branch
      %39 = sbr.rel (0) target = $region17
    $region16: #{tpu_custom_call.1} parent=1 // pred_region
      %41 = dma.done [#allocation4], 256
    $region17: #{tpu_custom_call.1} parent=1 // pred_fallthru
      _
    %42 = vsyncpa [#allocation3], 1
    %43 = vsyncpa [#allocation4], 1

</llo_original>
